<compile_context>
chip_gen: v6e
topology: v6e:2x2x1
jax: 0.10.0
libtpu: 0.0.40
codegen_flags: <defaults>
</compile_context>

<pallas_src>
import jax
import jax.numpy as jnp
from jax.experimental import pallas as pl
from jax.experimental.pallas import tpu as pltpu


# ---------------------------------------------------------------------------
# Config (mirrors the Dict the PyTorch module reads).
# ---------------------------------------------------------------------------
CFG = {
    "model_params": {"future_num_frames": 8},            # trajectory_length = 16
    "embed_params": {"emb_dim": 16},
    "cvae_cfg": {"latent_dim": 16, "decoder_layers": [32, 64]},
}

LATENT_DIM = CFG["cvae_cfg"]["latent_dim"]
EMB_DIM = CFG["embed_params"]["emb_dim"]
DECODER_LAYERS = CFG["cvae_cfg"]["decoder_layers"]
TRAJ_LEN = CFG["model_params"]["future_num_frames"] * 2
IN_DIM = LATENT_DIM + EMB_DIM                             # 32
LAYER_SIZES = [IN_DIM] + DECODER_LAYERS                   # [32, 32, 64]
ALL_SIZES = LAYER_SIZES + [TRAJ_LEN]                      # [32, 32, 64, 16]

# MACs per batch element (for the cost estimate).
_MACS_PER_ELEM = sum(a * b for a, b in zip(ALL_SIZES[:-1], ALL_SIZES[1:]))  # 4096


def _round_up(x, m):
    return ((x + m - 1) // m) * m


def _cdiv(a, b):
    return -(-a // b)


def _choose_tiling(bs, block_batch):
    """Waste-bounded, lane-aligned batch tiling.

    grid = cdiv(bs, block_batch); tb = round_up(cdiv(bs, grid), 128).
    Grid is made even when >1 so v7x's two TensorCores split it evenly.
    """
    bb = _round_up(max(int(block_batch), 128), 128)       # defensive 128-align
    grid_n = max(1, _cdiv(bs, bb))
    if grid_n >= 2 and grid_n % 2 == 1:
        grid_n += 1                                        # even grid for 2 TCs
    tb = _round_up(_cdiv(bs, grid_n), 128)
    padded_bs = tb * grid_n
    return tb, grid_n, padded_bs


# ---------------------------------------------------------------------------
# Pallas kernel: full decoder forward for one batch block.
# All activations are [features, batch_block] (batch on lanes).
# Refs: xeT (concatenated input), (W_i, b_i) for hidden layers, (W_rec, b_rec),
#       outT.  Weights are PyTorch-layout [out, in] bf16; biases [out, 1] f32.
# ---------------------------------------------------------------------------
def decoder_kernel(xe_ref, *rest):
    out_ref = rest[-1]
    p = rest[:-1]

    h = xe_ref[...]                                        # bf16 [IN_DIM, tb]

    # Hidden Linear + ReLU layers (f32 accumulation & bias, bf16 ReLU).
    idx = 0
    for _ in range(len(DECODER_LAYERS)):
        w = p[idx][...]
        b = p[idx + 1][...]
        idx += 2
        z = jnp.dot(w, h, preferred_element_type=jnp.float32) + b
        h = jnp.maximum(z.astype(w.dtype), 0)              # ReLU on bf16 (2x VPU)

    # Reconstruction head (no activation), f32 out.
    w_rec = p[idx][...]
    b_rec = p[idx + 1][...]
    out_ref[...] = (
        jnp.dot(w_rec, h, preferred_element_type=jnp.float32) + b_rec)


# ---------------------------------------------------------------------------
# Wrapper
# ---------------------------------------------------------------------------
def _prep_params(params, mxu_dtype):
    """params: list of (W [out,in], b [out]) in PyTorch layout."""
    flat = []
    for w, b in params:
        flat.append(jnp.asarray(w, mxu_dtype))             # [out, in] bf16
        flat.append(jnp.asarray(b, jnp.float32)[:, None])  # [out, 1]  f32
    return flat


def decoder_forward(x, emb, params, *, block_batch=32768,
                    mxu_dtype=jnp.bfloat16, transpose_output=True):
    """x: [bs, latent_dim], emb: [bs, emb_dim] -> [bs, TRAJ_LEN] (float32).

    With transpose_output=False the natural kernel layout [TRAJ_LEN, bs] is
    returned so a downstream consumer can fuse the transpose itself.
    """
    bs = x.shape[0]
    tb, grid_n, padded_bs = _choose_tiling(bs, block_batch)

    # Fused input prep: concat -> bf16 cast -> row-pad -> transpose.
    # Padding the batch rows *before* the transpose keeps this a single
    # XLA fusion (no extra copy pass).
    xe = jnp.concatenate([x, emb], axis=1).astype(mxu_dtype)   # [bs, IN_DIM]
    if padded_bs != bs:
        xe = jnp.pad(xe, ((0, padded_bs - bs), (0, 0)))
    xe_t = xe.T                                                # [IN_DIM, padded_bs]

    flat_params = _prep_params(params, mxu_dtype)

    in_specs = [pl.BlockSpec((IN_DIM, tb), lambda i: (0, i))]
    # Weights/biases: constant index_map -> DMA'd once, VMEM-resident.
    in_specs += [pl.BlockSpec(p.shape, lambda i: (0, 0)) for p in flat_params]

    # Scoped-VMEM budget scales with the tile; >=32 MiB (above v5e's 16 MiB
    # default), capped at 48 MiB to stay inside v7x's 64 MiB/TC.
    vmem_limit = int(min(48 * 2**20, max(32 * 2**20, 1024 * tb)))

    cost = pl.CostEstimate(
        flops=2 * _MACS_PER_ELEM * padded_bs,
        transcendentals=0,
        bytes_accessed=(IN_DIM * 2 + TRAJ_LEN * 4) * padded_bs,
    )

    out_t = pl.pallas_call(
        decoder_kernel,
        out_shape=jax.ShapeDtypeStruct((TRAJ_LEN, padded_bs), jnp.float32),
        grid=(grid_n,),
        in_specs=in_specs,
        out_specs=pl.BlockSpec((TRAJ_LEN, tb), lambda i: (0, i)),
        compiler_params=pltpu.CompilerParams(
            dimension_semantics=("parallel",),              # v7x: both TCs
            vmem_limit_bytes=vmem_limit),
        cost_estimate=cost,
    )(xe_t, *flat_params)

    out_t = out_t[:, :bs]                                   # drop batch padding
    if transpose_output:
        return out_t.T                                      # [bs, TRAJ_LEN] f32
    return out_t                                            # [TRAJ_LEN, bs] f32


# ---------------------------------------------------------------------------
# Deterministic parameter init (synthetic; same shapes as nn.Linear).
# ---------------------------------------------------------------------------
def init_params(key):
    params = []
    for in_size, out_size in zip(ALL_SIZES[:-1], ALL_SIZES[1:]):
        key, kw, kb = jax.random.split(key, 3)
        bound = 1.0 / jnp.sqrt(in_size)
        w = jax.random.uniform(kw, (out_size, in_size), jnp.float32, -bound, bound)
        b = jax.random.uniform(kb, (out_size,), jnp.float32, -bound, bound)
        params.append((w, b))
    return params


def decoder_reference(x, emb, params, mxu_dtype=jnp.float32):
    """Pure-JAX reference. mxu_dtype=bf16 mirrors the kernel's precision."""
    h = jnp.concatenate([x, emb], axis=1)
    n_hidden = len(DECODER_LAYERS)
    for i in range(n_hidden):
        w, b = params[i]
        hw = jnp.dot(h.astype(mxu_dtype), w.T.astype(mxu_dtype),
                     preferred_element_type=jnp.float32)
        h = jnp.maximum(hw + b, 0.0)
    w, b = params[n_hidden]
    return jnp.dot(h.astype(mxu_dtype), w.T.astype(mxu_dtype),
                   preferred_element_type=jnp.float32) + b


if __name__ == "__main__":
    key = jax.random.PRNGKey(0)
    k_params, kx, ke = jax.random.split(key, 3)

    bs = 260                       # not a multiple of 128: exercises padding path
    params = init_params(k_params)
    x = jax.random.normal(kx, (bs, LATENT_DIM), jnp.float32)
    emb = jax.random.normal(ke, (bs, EMB_DIM), jnp.float32)

    # Small block so this example runs a multi-step (even, grid=4) pipelined
    # grid; production uses the default 32768-lane block.
    out = decoder_forward(x, emb, params, block_batch=128)
    out = jax.block_until_ready(out)
    assert out.shape == (bs, TRAJ_LEN)

    # Also exercise the default (single-block) tiling path.
    out_big = jax.block_until_ready(decoder_forward(x, emb, params))
    assert out_big.shape == (bs, TRAJ_LEN)

    # Precision-matched reference (bf16 MXU operands, f32 accumulation).
    ref_bf16 = decoder_reference(x, emb, params, mxu_dtype=jnp.bfloat16)
    assert jnp.allclose(out, ref_bf16, atol=2e-3, rtol=2e-3), "mismatch vs bf16 ref"
    assert jnp.allclose(out_big, ref_bf16, atol=2e-3, rtol=2e-3), "mismatch vs bf16 ref"

    # Full-f32 PyTorch-semantics reference (loose tol for bf16 rounding).
    ref_f32 = decoder_reference(x, emb, params, mxu_dtype=jnp.float32)
    assert jnp.allclose(out, ref_f32, atol=5e-2, rtol=5e-2), "mismatch vs f32 ref"

    print("KERNEL_OK")
</pallas_src>

<mosaic_0001>
module attributes {stable_mosaic.version = 11 : i64} {
  func.func @decoder_kernel(%arg0: i32, %arg1: memref<32x128xbf16, #tpu.memory_space<vmem>>, %arg2: memref<32x32xbf16, #tpu.memory_space<vmem>>, %arg3: memref<32x1xf32, #tpu.memory_space<vmem>>, %arg4: memref<64x32xbf16, #tpu.memory_space<vmem>>, %arg5: memref<64x1xf32, #tpu.memory_space<vmem>>, %arg6: memref<16x64xbf16, #tpu.memory_space<vmem>>, %arg7: memref<16x1xf32, #tpu.memory_space<vmem>>, %arg8: memref<16x128xf32, #tpu.memory_space<vmem>>) attributes {dimension_semantics = [#tpu.dimension_semantics<parallel>], iteration_bounds = array<i64: 4>, scalar_prefetch = 0 : i64, scratch_operands = 0 : i64, tpu.core_type = #tpu.core_type<tc>, window_params = [{transform_indices = @transform_0, window_bounds = array<i64: 32, 128>}, {pipeline_mode = #tpu.pipeline_mode<synchronous>, transform_indices = @transform_1, window_bounds = array<i64: 32, 32>}, {pipeline_mode = #tpu.pipeline_mode<synchronous>, transform_indices = @transform_2, window_bounds = array<i64: 32, 1>}, {pipeline_mode = #tpu.pipeline_mode<synchronous>, transform_indices = @transform_3, window_bounds = array<i64: 64, 32>}, {pipeline_mode = #tpu.pipeline_mode<synchronous>, transform_indices = @transform_4, window_bounds = array<i64: 64, 1>}, {pipeline_mode = #tpu.pipeline_mode<synchronous>, transform_indices = @transform_5, window_bounds = array<i64: 16, 64>}, {pipeline_mode = #tpu.pipeline_mode<synchronous>, transform_indices = @transform_6, window_bounds = array<i64: 16, 1>}, {transform_indices = @transform_7, window_bounds = array<i64: 16, 128>}]} {
    %c0 = arith.constant 0 : index
    %c0_0 = arith.constant 0 : index
    %0 = vector.load %arg1[%c0, %c0_0] : memref<32x128xbf16, #tpu.memory_space<vmem>>, vector<32x128xbf16>
    %c0_1 = arith.constant 0 : index
    %c0_2 = arith.constant 0 : index
    %1 = vector.load %arg2[%c0_1, %c0_2] : memref<32x32xbf16, #tpu.memory_space<vmem>>, vector<32x32xbf16>
    %c0_3 = arith.constant 0 : index
    %c0_4 = arith.constant 0 : index
    %2 = vector.load %arg3[%c0_3, %c0_4] : memref<32x1xf32, #tpu.memory_space<vmem>>, vector<32x1xf32>
    %cst = arith.constant dense<0.000000e+00> : vector<32x128xf32>
    %3 = tpu.matmul %1, %0, %cst {dimension_numbers = #tpu.dot_dimension_numbers<[1], [0], [0], [1], [0, 0, 1, 1], [], []>} : vector<32x32xbf16>, vector<32x128xbf16>, vector<32x128xf32> -> vector<32x128xf32>
    %4 = vector.broadcast %2 : vector<32x1xf32> to vector<32x128xf32>
    %5 = arith.addf %3, %4 : vector<32x128xf32>
    %6 = arith.truncf %5 : vector<32x128xf32> to vector<32x128xbf16>
    %cst_5 = arith.constant 0.000000e+00 : bf16
    %7 = vector.broadcast %cst_5 : bf16 to vector<32x128xbf16>
    %8 = arith.maximumf %6, %7 : vector<32x128xbf16>
    %c0_6 = arith.constant 0 : index
    %c0_7 = arith.constant 0 : index
    %9 = vector.load %arg4[%c0_6, %c0_7] : memref<64x32xbf16, #tpu.memory_space<vmem>>, vector<64x32xbf16>
    %c0_8 = arith.constant 0 : index
    %c0_9 = arith.constant 0 : index
    %10 = vector.load %arg5[%c0_8, %c0_9] : memref<64x1xf32, #tpu.memory_space<vmem>>, vector<64x1xf32>
    %cst_10 = arith.constant dense<0.000000e+00> : vector<64x128xf32>
    %11 = tpu.matmul %9, %8, %cst_10 {dimension_numbers = #tpu.dot_dimension_numbers<[1], [0], [0], [1], [0, 0, 1, 1], [], []>} : vector<64x32xbf16>, vector<32x128xbf16>, vector<64x128xf32> -> vector<64x128xf32>
    %12 = vector.broadcast %10 : vector<64x1xf32> to vector<64x128xf32>
    %13 = arith.addf %11, %12 : vector<64x128xf32>
    %14 = arith.truncf %13 : vector<64x128xf32> to vector<64x128xbf16>
    %cst_11 = arith.constant 0.000000e+00 : bf16
    %15 = vector.broadcast %cst_11 : bf16 to vector<64x128xbf16>
    %16 = arith.maximumf %14, %15 : vector<64x128xbf16>
    %c0_12 = arith.constant 0 : index
    %c0_13 = arith.constant 0 : index
    %17 = vector.load %arg6[%c0_12, %c0_13] : memref<16x64xbf16, #tpu.memory_space<vmem>>, vector<16x64xbf16>
    %c0_14 = arith.constant 0 : index
    %c0_15 = arith.constant 0 : index
    %18 = vector.load %arg7[%c0_14, %c0_15] : memref<16x1xf32, #tpu.memory_space<vmem>>, vector<16x1xf32>
    %cst_16 = arith.constant dense<0.000000e+00> : vector<16x128xf32>
    %19 = tpu.matmul %17, %16, %cst_16 {dimension_numbers = #tpu.dot_dimension_numbers<[1], [0], [0], [1], [0, 0, 1, 1], [], []>} : vector<16x64xbf16>, vector<64x128xbf16>, vector<16x128xf32> -> vector<16x128xf32>
    %20 = vector.broadcast %18 : vector<16x1xf32> to vector<16x128xf32>
    %21 = arith.addf %19, %20 : vector<16x128xf32>
    %c0_17 = arith.constant 0 : index
    %c0_18 = arith.constant 0 : index
    %22 = vector.load %arg8[%c0_17, %c0_18] : memref<16x128xf32, #tpu.memory_space<vmem>>, vector<16x128xf32>
    tpu.vector_store %arg8[%c0_17, %c0_18], %21 {strides = array<i32>} : memref<16x128xf32, #tpu.memory_space<vmem>>, vector<16x128xf32>,
    return
  }
  func.func @transform_0(%arg0: i32) -> (i32, i32) {
    %c0_i32 = arith.constant 0 : i32
    %c0_i32_0 = arith.constant 0 : i32
    return %c0_i32, %arg0 : i32, i32
  }
  func.func @transform_1(%arg0: i32) -> (i32, i32) {
    %c0_i32 = arith.constant 0 : i32
    %c0_i32_0 = arith.constant 0 : i32
    %c0_i32_1 = arith.constant 0 : i32
    return %c0_i32, %c0_i32_0 : i32, i32
  }
  func.func @transform_2(%arg0: i32) -> (i32, i32) {
    %c0_i32 = arith.constant 0 : i32
    %c0_i32_0 = arith.constant 0 : i32
    %c0_i32_1 = arith.constant 0 : i32
    return %c0_i32, %c0_i32_0 : i32, i32
  }
  func.func @transform_3(%arg0: i32) -> (i32, i32) {
    %c0_i32 = arith.constant 0 : i32
    %c0_i32_0 = arith.constant 0 : i32
    %c0_i32_1 = arith.constant 0 : i32
    return %c0_i32, %c0_i32_0 : i32, i32
  }
  func.func @transform_4(%arg0: i32) -> (i32, i32) {
    %c0_i32 = arith.constant 0 : i32
    %c0_i32_0 = arith.constant 0 : i32
    %c0_i32_1 = arith.constant 0 : i32
    return %c0_i32, %c0_i32_0 : i32, i32
  }
  func.func @transform_5(%arg0: i32) -> (i32, i32) {
    %c0_i32 = arith.constant 0 : i32
    %c0_i32_0 = arith.constant 0 : i32
    %c0_i32_1 = arith.constant 0 : i32
    return %c0_i32, %c0_i32_0 : i32, i32
  }
  func.func @transform_6(%arg0: i32) -> (i32, i32) {
    %c0_i32 = arith.constant 0 : i32
    %c0_i32_0 = arith.constant 0 : i32
    %c0_i32_1 = arith.constant 0 : i32
    return %c0_i32, %c0_i32_0 : i32, i32
  }
  func.func @transform_7(%arg0: i32) -> (i32, i32) {
    %c0_i32 = arith.constant 0 : i32
    %c0_i32_0 = arith.constant 0 : i32
    return %c0_i32, %arg0 : i32, i32
  }
}

</mosaic_0001>

<llo_original>
// kernel: tpu_custom_call.1
$region0: #{tpu_custom_call.1}
  #allocation0 [shape = 'u32[]', space=smem, size = 0x4, offset = 0x4, fixed_abs, tag = 'smem constant byte address 0x4 - core index']
  #allocation1 [shape = 'u32[144,128]{1,0:T(1,128)}', space=vmem, size = 0x12000, scoped, tag = 'internal scratch']
  %s0 = inlined_call_operand.vmem [shape: bf16[32,512], index: 0, kind: input, shape index: {}]
  %s1 = inlined_call_operand.vmem [shape: bf16[32,32], index: 1, kind: input, shape index: {}]
  %s2 = inlined_call_operand.vmem [shape: f32[32,1], index: 2, kind: input, shape index: {}]
  %s3 = inlined_call_operand.vmem [shape: bf16[64,32], index: 3, kind: input, shape index: {}]
  %s4 = inlined_call_operand.vmem [shape: f32[64,1], index: 4, kind: input, shape index: {}]
  %s5 = inlined_call_operand.vmem [shape: bf16[16,64], index: 5, kind: input, shape index: {}]
  %s6 = inlined_call_operand.vmem [shape: f32[16,1], index: 6, kind: input, shape index: {}]
  %s7 = inlined_call_operand.hbm [shape: f32[16,512], index: 7, kind: output, shape index: {}]
  %s8 = sld [smem:[#allocation0]]
  $region102: #{tpu_custom_call.1} parent=0
    _
  %s10 = ssub.s32 1, %s8
  %s11 = scalar_select 0, %s10, %s8
  $region1: #{tpu_custom_call.1} parent=0
    #allocation2 [shape = 'u8[16384]{0}', space=vmem, size = 0x4000, scoped, tag = 'input window, operand 0']
    #allocation3 [shape = 'u8[16384]{0}', space=vmem, size = 0x4000, scoped, tag = 'output window, operand 0']
    #allocation4 [shape = 's32[2]{0}', space=sflag, size = 0x8, scoped, tag = 'scoped memory for tpu_custom_call.1']
    %12 = vsyncpa [#allocation4], 0
    %s13 = scalar_lea.sflag [#allocation4], 1
    %14 = vsyncpa %s13, 0
    loop: start=0, step=1, limit=6
    $region2: #{tpu_custom_call.1} parent=1 // loop_pre_header
      _
    $region3: #{tpu_custom_call.1} parent=1 // loop_header
      %s16 = sphi 0, %s20
      %p17 = scmp.ge.s32.totalorder %s16, 6
      %s26 = sphi 0, %s28
      %s29 = sphi 0, %s26
      %s30 = sphi 0, %s29
      %s46 = sphi 0, %s30
      %s50 = sphi 0, %s50
      %s52 = sphi 0, %s50
      %s53 = sphi 0, %s52
      %s67 = sphi 0, %s53
      %s71 = sphi 0, %s71
      %s73 = sphi 0, %s71
      %s74 = sphi 0, %s73
      %s88 = sphi 0, %s74
      %s92 = sphi 0, %s92
      %s94 = sphi 0, %s92
      %s95 = sphi 0, %s94
      %s109 = sphi 0, %s95
      %s113 = sphi 0, %s113
      %s115 = sphi 0, %s113
      %s116 = sphi 0, %s115
      %s130 = sphi 0, %s116
      %s134 = sphi 0, %s134
      %s136 = sphi 0, %s134
      %s137 = sphi 0, %s136
      %s151 = sphi 0, %s137
      %s155 = sphi 0, %s155
      %s157 = sphi 0, %s155
      %s158 = sphi 0, %s157
      %s172 = sphi 0, %s158
      %s178 = sphi 0, %s180
      %s181 = sphi 0, %s178
      %s182 = sphi 0, %s181
      %s198 = sphi 0, %s182
    $region4: #{tpu_custom_call.1} parent=1 // loop_header_branch
      %19 = sbr.rel (%p17) target = $region8
    $region5: #{tpu_custom_call.1} parent=1 // loop_body
      %s21 = ssub.s32 %s16, 1
      %s22 = ssub.s32 %s16, 2
      %s23 = sadd.s32 %s16, 1
      %s24 = ssub.s32 %s16, %s23
      %p25 = scmp.eq.s32.totalorder %s24, 0
      %s27 = sadd.s32 %s26, 1
      %s28 = scalar_select %p25, %s26, %s27
      %p31 = pneg %p25
      %p32 = scmp.eq.s32.totalorder %s16, 3
      %p33 = por %p31, %p32
      %p34 = scmp.ne.s32.totalorder %s26, %s29
      %p35 = scmp.eq.s32.totalorder %s16, 0
      %p36 = por %p34, %p35
      %p37 = scmp.ne.s32.totalorder %s26, %s29
      %p38 = scmp.eq.s32.totalorder %s21, 3
      %p39 = por %p37, %p38
      %p40 = scmp.ne.s32.totalorder %s29, %s30
      %p41 = scmp.eq.s32.totalorder %s21, 0
      %p42 = por %p40, %p41
      %p43 = scmp.ne.s32.totalorder %s29, %s30
      %p44 = scmp.eq.s32.totalorder %s22, 3
      %p45 = por %p43, %p44
      %p47 = scmp.ne.s32.totalorder %s30, %s46
      %p48 = scmp.eq.s32.totalorder %s22, 0
      %p49 = por %p47, %p48
      %s51 = sadd.s32 %s50, 1
      %p54 = scmp.eq.s32.totalorder %s16, 3
      %p55 = scmp.ne.s32.totalorder %s50, %s52
      %p56 = scmp.eq.s32.totalorder %s16, 0
      %p57 = por %p55, %p56
      %p58 = scmp.ne.s32.totalorder %s50, %s52
      %p59 = scmp.eq.s32.totalorder %s21, 3
      %p60 = por %p58, %p59
      %p61 = scmp.ne.s32.totalorder %s52, %s53
      %p62 = scmp.eq.s32.totalorder %s21, 0
      %p63 = por %p61, %p62
      %p64 = scmp.ne.s32.totalorder %s52, %s53
      %p65 = scmp.eq.s32.totalorder %s22, 3
      %p66 = por %p64, %p65
      %p68 = scmp.ne.s32.totalorder %s53, %s67
      %p69 = scmp.eq.s32.totalorder %s22, 0
      %p70 = por %p68, %p69
      %s72 = sadd.s32 %s71, 1
      %p75 = scmp.eq.s32.totalorder %s16, 3
      %p76 = scmp.ne.s32.totalorder %s71, %s73
      %p77 = scmp.eq.s32.totalorder %s16, 0
      %p78 = por %p76, %p77
      %p79 = scmp.ne.s32.totalorder %s71, %s73
      %p80 = scmp.eq.s32.totalorder %s21, 3
      %p81 = por %p79, %p80
      %p82 = scmp.ne.s32.totalorder %s73, %s74
      %p83 = scmp.eq.s32.totalorder %s21, 0
      %p84 = por %p82, %p83
      %p85 = scmp.ne.s32.totalorder %s73, %s74
      %p86 = scmp.eq.s32.totalorder %s22, 3
      %p87 = por %p85, %p86
      %p89 = scmp.ne.s32.totalorder %s74, %s88
      %p90 = scmp.eq.s32.totalorder %s22, 0
      %p91 = por %p89, %p90
      %s93 = sadd.s32 %s92, 1
      %p96 = scmp.eq.s32.totalorder %s16, 3
      %p97 = scmp.ne.s32.totalorder %s92, %s94
      %p98 = scmp.eq.s32.totalorder %s16, 0
      %p99 = por %p97, %p98
      %p100 = scmp.ne.s32.totalorder %s92, %s94
      %p101 = scmp.eq.s32.totalorder %s21, 3
      %p102 = por %p100, %p101
      %p103 = scmp.ne.s32.totalorder %s94, %s95
      %p104 = scmp.eq.s32.totalorder %s21, 0
      %p105 = por %p103, %p104
      %p106 = scmp.ne.s32.totalorder %s94, %s95
      %p107 = scmp.eq.s32.totalorder %s22, 3
      %p108 = por %p106, %p107
      %p110 = scmp.ne.s32.totalorder %s95, %s109
      %p111 = scmp.eq.s32.totalorder %s22, 0
      %p112 = por %p110, %p111
      %s114 = sadd.s32 %s113, 1
      %p117 = scmp.eq.s32.totalorder %s16, 3
      %p118 = scmp.ne.s32.totalorder %s113, %s115
      %p119 = scmp.eq.s32.totalorder %s16, 0
      %p120 = por %p118, %p119
      %p121 = scmp.ne.s32.totalorder %s113, %s115
      %p122 = scmp.eq.s32.totalorder %s21, 3
      %p123 = por %p121, %p122
      %p124 = scmp.ne.s32.totalorder %s115, %s116
      %p125 = scmp.eq.s32.totalorder %s21, 0
      %p126 = por %p124, %p125
      %p127 = scmp.ne.s32.totalorder %s115, %s116
      %p128 = scmp.eq.s32.totalorder %s22, 3
      %p129 = por %p127, %p128
      %p131 = scmp.ne.s32.totalorder %s116, %s130
      %p132 = scmp.eq.s32.totalorder %s22, 0
      %p133 = por %p131, %p132
      %s135 = sadd.s32 %s134, 1
      %p138 = scmp.eq.s32.totalorder %s16, 3
      %p139 = scmp.ne.s32.totalorder %s134, %s136
      %p140 = scmp.eq.s32.totalorder %s16, 0
      %p141 = por %p139, %p140
      %p142 = scmp.ne.s32.totalorder %s134, %s136
      %p143 = scmp.eq.s32.totalorder %s21, 3
      %p144 = por %p142, %p143
      %p145 = scmp.ne.s32.totalorder %s136, %s137
      %p146 = scmp.eq.s32.totalorder %s21, 0
      %p147 = por %p145, %p146
      %p148 = scmp.ne.s32.totalorder %s136, %s137
      %p149 = scmp.eq.s32.totalorder %s22, 3
      %p150 = por %p148, %p149
      %p152 = scmp.ne.s32.totalorder %s137, %s151
      %p153 = scmp.eq.s32.totalorder %s22, 0
      %p154 = por %p152, %p153
      %s156 = sadd.s32 %s155, 1
      %p159 = scmp.eq.s32.totalorder %s16, 3
      %p160 = scmp.ne.s32.totalorder %s155, %s157
      %p161 = scmp.eq.s32.totalorder %s16, 0
      %p162 = por %p160, %p161
      %p163 = scmp.ne.s32.totalorder %s155, %s157
      %p164 = scmp.eq.s32.totalorder %s21, 3
      %p165 = por %p163, %p164
      %p166 = scmp.ne.s32.totalorder %s157, %s158
      %p167 = scmp.eq.s32.totalorder %s21, 0
      %p168 = por %p166, %p167
      %p169 = scmp.ne.s32.totalorder %s157, %s158
      %p170 = scmp.eq.s32.totalorder %s22, 3
      %p171 = por %p169, %p170
      %p173 = scmp.ne.s32.totalorder %s158, %s172
      %p174 = scmp.eq.s32.totalorder %s22, 0
      %p175 = por %p173, %p174
      %s176 = ssub.s32 %s16, %s23
      %p177 = scmp.eq.s32.totalorder %s176, 0
      %s179 = sadd.s32 %s178, 1
      %s180 = scalar_select %p177, %s178, %s179
      %p183 = pneg %p177
      %p184 = scmp.eq.s32.totalorder %s16, 3
      %p185 = por %p183, %p184
      %p186 = scmp.ne.s32.totalorder %s178, %s181
      %p187 = scmp.eq.s32.totalorder %s16, 0
      %p188 = por %p186, %p187
      %p189 = scmp.ne.s32.totalorder %s178, %s181
      %p190 = scmp.eq.s32.totalorder %s21, 3
      %p191 = por %p189, %p190
      %p192 = scmp.ne.s32.totalorder %s181, %s182
      %p193 = scmp.eq.s32.totalorder %s21, 0
      %p194 = por %p192, %p193
      %p195 = scmp.ne.s32.totalorder %s181, %s182
      %p196 = scmp.eq.s32.totalorder %s22, 3
      %p197 = por %p195, %p196
      %p199 = scmp.ne.s32.totalorder %s182, %s198
      %p200 = scmp.eq.s32.totalorder %s22, 0
      %p201 = por %p199, %p200
      %p202 = scmp.le.s32.totalorder 1, %s16
      %p203 = scmp.lt.s32.totalorder %s16, 5
      %p204 = pnand %p202, %p203
      %p205 = pneg %p204
      // Predicated region
      $region9: #{tpu_custom_call.1} parent=5 // pred_check
        _
      $region10: #{tpu_custom_call.1} parent=5 // pred_check_branch
        %207 = sbr.rel (%p204) target = $region12
      $region11: #{tpu_custom_call.1} parent=5 // pred_region
        %s208 = ssub.s32 %s16, 1
        // Predicated region
        $region13: #{tpu_custom_call.1} parent=11 // pred_check
          %p209 = pneg %p63
        $region14: #{tpu_custom_call.1} parent=11 // pred_check_branch
          %211 = sbr.rel (%p209) target = $region16
        $region15: #{tpu_custom_call.1} parent=11 // pred_region
          _
        $region16: #{tpu_custom_call.1} parent=11 // pred_fallthru
          _
        // Predicated region
        $region17: #{tpu_custom_call.1} parent=11 // pred_check
          %p212 = pneg %p84
        $region18: #{tpu_custom_call.1} parent=11 // pred_check_branch
          %214 = sbr.rel (%p212) target = $region20
        $region19: #{tpu_custom_call.1} parent=11 // pred_region
          _
        $region20: #{tpu_custom_call.1} parent=11 // pred_fallthru
          _
        // Predicated region
        $region21: #{tpu_custom_call.1} parent=11 // pred_check
          %p215 = pneg %p105
        $region22: #{tpu_custom_call.1} parent=11 // pred_check_branch
          %217 = sbr.rel (%p215) target = $region24
        $region23: #{tpu_custom_call.1} parent=11 // pred_region
          _
        $region24: #{tpu_custom_call.1} parent=11 // pred_fallthru
          _
        // Predicated region
        $region25: #{tpu_custom_call.1} parent=11 // pred_check
          %p218 = pneg %p126
        $region26: #{tpu_custom_call.1} parent=11 // pred_check_branch
          %220 = sbr.rel (%p218) target = $region28
        $region27: #{tpu_custom_call.1} parent=11 // pred_region
          _
        $region28: #{tpu_custom_call.1} parent=11 // pred_fallthru
          _
        // Predicated region
        $region29: #{tpu_custom_call.1} parent=11 // pred_check
          %p221 = pneg %p147
        $region30: #{tpu_custom_call.1} parent=11 // pred_check_branch
          %223 = sbr.rel (%p221) target = $region32
        $region31: #{tpu_custom_call.1} parent=11 // pred_region
          _
        $region32: #{tpu_custom_call.1} parent=11 // pred_fallthru
          _
        // Predicated region
        $region33: #{tpu_custom_call.1} parent=11 // pred_check
          %p224 = pneg %p168
        $region34: #{tpu_custom_call.1} parent=11 // pred_check_branch
          %226 = sbr.rel (%p224) target = $region36
        $region35: #{tpu_custom_call.1} parent=11 // pred_region
          _
        $region36: #{tpu_custom_call.1} parent=11 // pred_fallthru
          _
      $region12: #{tpu_custom_call.1} parent=5 // pred_fallthru
        _
      %p227 = scmp.lt.s32.totalorder %s16, 4
      // Predicated region
      $region37: #{tpu_custom_call.1} parent=5 // pred_check
        %p228 = pneg %p227
      $region38: #{tpu_custom_call.1} parent=5 // pred_check_branch
        %230 = sbr.rel (%p228) target = $region40
      $region39: #{tpu_custom_call.1} parent=5 // pred_region
        // Predicated region
        $region41: #{tpu_custom_call.1} parent=39 // pred_check
          %p231 = pneg %p36
        $region42: #{tpu_custom_call.1} parent=39 // pred_check_branch
          %233 = sbr.rel (%p231) target = $region44
        $region43: #{tpu_custom_call.1} parent=39 // pred_region
          %s234 = sand.u32 %s26, 1
          %s235 = sand.u32 %s26, 1
          %s236 = smul.addr %s235, 16
          %s237 = scalar_lea.vmem [#allocation2], %s236
          %s238 = smul.addr %s16, 4
          %s239 = scalar_lea.vmem %s0, %s238
          // Predicated region
          $region45: #{tpu_custom_call.1} parent=43 // pred_check
            _
          $region46: #{tpu_custom_call.1} parent=43 // pred_check_branch
            %241 = sbr.rel (0) target = $region48
          $region47: #{tpu_custom_call.1} parent=43 // pred_region
            // Predicated region
            $region49: #{tpu_custom_call.1} parent=47 // pred_check
              _
            $region50: #{tpu_custom_call.1} parent=47 // pred_check_branch
              %243 = sbr.rel target = $region52
            $region51: #{tpu_custom_call.1} parent=47 // pred_region
              // Predicated region
              $region64: #{tpu_custom_call.1} parent=51 // pred_check
                _
              $region65: #{tpu_custom_call.1} parent=51 // pred_check_branch
                %265 = sbr.rel (0) target = $region67
              $region66: #{tpu_custom_call.1} parent=51 // pred_region
                loop: start=0, step=1, limit=1
                $region68: #{tpu_custom_call.1} parent=66 // loop_pre_header
                  _
                $region69: #{tpu_custom_call.1} parent=66 // loop_header
                  %s267 = sphi 0, %s271
                  %p268 = scmp.ge.s32.totalorder %s267, 1
                  %s272 = sphi %s239, %s239
                  %s273 = sphi %s237, %s237
                $region70: #{tpu_custom_call.1} parent=66 // loop_header_branch
                  %270 = sbr.rel (%p268) target = $region74
                $region71: #{tpu_custom_call.1} parent=66 // loop_body
                  _
                $region72: #{tpu_custom_call.1} parent=66 // loop_footer
                  %s271 = sadd.s32 1, %s267
                $region73: #{tpu_custom_call.1} parent=66 // loop_footer_branch
                  %266 = sbr.rel target = $region69
                $region74: #{tpu_custom_call.1} parent=66 // loop_exit
                  _
                %s275 = ssub.s32 16, 1
                loop: start=0, step=1, limit=1
                $region75: #{tpu_custom_call.1} parent=66 // loop_pre_header
                  _
                $region76: #{tpu_custom_call.1} parent=66 // loop_header
                  %s277 = sphi 0, %s281
                  %p278 = scmp.ge.s32.totalorder %s277, 1
                  %s282 = sphi %s239, %s239
                  %s283 = sphi %s237, %s237
                $region77: #{tpu_custom_call.1} parent=66 // loop_header_branch
                  %280 = sbr.rel (%p278) target = $region81
                $region78: #{tpu_custom_call.1} parent=66 // loop_body
                  %v284 = vld [vmem:[%s282] sm:%s275]
                  %285 = vst [vmem:[%s283] sm:%s275] %v284
                  %v286 = vld [vmem:[%s282 + $0x10] sm:%s275]
                  %287 = vst [vmem:[%s283 + $0x4] sm:%s275] %v286
                  %v288 = vld [vmem:[%s282 + $0x20] sm:%s275]
                  %289 = vst [vmem:[%s283 + $0x8] sm:%s275] %v288
                  %v290 = vld [vmem:[%s282 + $0x30] sm:%s275]
                  %291 = vst [vmem:[%s283 + $0xc] sm:%s275] %v290
                $region79: #{tpu_custom_call.1} parent=66 // loop_footer
                  %s281 = sadd.s32 1, %s277
                $region80: #{tpu_custom_call.1} parent=66 // loop_footer_branch
                  %276 = sbr.rel target = $region76
                $region81: #{tpu_custom_call.1} parent=66 // loop_exit
                  _
              $region67: #{tpu_custom_call.1} parent=51 // pred_fallthru
                _
            $region52: #{tpu_custom_call.1} parent=47 // pred_fallthru
              _
            // Predicated region
            $region53: #{tpu_custom_call.1} parent=47 // pred_check
              _
            $region54: #{tpu_custom_call.1} parent=47 // pred_check_branch
              %245 = sbr.rel (0) target = $region56
            $region55: #{tpu_custom_call.1} parent=47 // pred_region
              %s247 = ssub.s32 16, 1
              loop: start=0, step=1, limit=1
              $region57: #{tpu_custom_call.1} parent=55 // loop_pre_header
                _
              $region58: #{tpu_custom_call.1} parent=55 // loop_header
                %s249 = sphi 0, %s253
                %p250 = scmp.ge.s32.totalorder %s249, 1
                %s254 = sphi %s239, %s239
                %s255 = sphi %s237, %s237
              $region59: #{tpu_custom_call.1} parent=55 // loop_header_branch
                %252 = sbr.rel (%p250) target = $region63
              $region60: #{tpu_custom_call.1} parent=55 // loop_body
                %v256 = vld [vmem:[%s254] sm:%s247]
                %257 = vst [vmem:[%s255] sm:%s247] %v256
                %v258 = vld [vmem:[%s254 + $0x10] sm:%s247]
                %259 = vst [vmem:[%s255 + $0x4] sm:%s247] %v258
                %v260 = vld [vmem:[%s254 + $0x20] sm:%s247]
                %261 = vst [vmem:[%s255 + $0x8] sm:%s247] %v260
                %v262 = vld [vmem:[%s254 + $0x30] sm:%s247]
                %263 = vst [vmem:[%s255 + $0xc] sm:%s247] %v262
              $region61: #{tpu_custom_call.1} parent=55 // loop_footer
                %s253 = sadd.s32 1, %s249
              $region62: #{tpu_custom_call.1} parent=55 // loop_footer_branch
                %248 = sbr.rel target = $region58
              $region63: #{tpu_custom_call.1} parent=55 // loop_exit
                _
            $region56: #{tpu_custom_call.1} parent=47 // pred_fallthru
              _
          $region48: #{tpu_custom_call.1} parent=43 // pred_fallthru
            _
          %292 = vnop
        $region44: #{tpu_custom_call.1} parent=39 // pred_fallthru
          _
      $region40: #{tpu_custom_call.1} parent=5 // pred_fallthru
        _
      %p293 = scmp.le.s32.totalorder 1, %s16
      %p294 = scmp.lt.s32.totalorder %s16, 5
      %p295 = pnand %p293, %p294
      %p296 = pneg %p295
      // Predicated region
      $region82: #{tpu_custom_call.1} parent=5 // pred_check
        _
      $region83: #{tpu_custom_call.1} parent=5 // pred_check_branch
        %298 = sbr.rel (%p295) target = $region85
      $region84: #{tpu_custom_call.1} parent=5 // pred_region
        %s299 = ssub.s32 %s16, 1
        %s300 = sand.u32 %s29, 1
        %s301 = sand.u32 %s29, 1
        %s302 = smul.addr %s301, 16
        %s303 = scalar_lea.vmem [#allocation2], %s302
        // Predicated region
        $region86: #{tpu_custom_call.1} parent=84 // pred_check
          %p304 = pneg %p42
        $region87: #{tpu_custom_call.1} parent=84 // pred_check_branch
          %306 = sbr.rel (%p304) target = $region89
        $region88: #{tpu_custom_call.1} parent=84 // pred_region
          _
        $region89: #{tpu_custom_call.1} parent=84 // pred_fallthru
          _
        %s307 = sand.u32 %s29, 1
        %s308 = sand.u32 %s29, 1
        %s309 = smul.addr %s308, 16
        %s310 = scalar_lea.vmem [#allocation2], %s309
        %p311 = pneg %p42
        %p312 = pneg %p39
        %p313 = pneg %p63
        %p314 = pneg %p60
        %p315 = pneg %p84
        %p316 = pneg %p81
        %p317 = pneg %p105
        %p318 = pneg %p102
        %p319 = pneg %p126
        %p320 = pneg %p123
        %p321 = pneg %p147
        %p322 = pneg %p144
        %p323 = pneg %p168
        %p324 = pneg %p165
        %p325 = pneg %p194
        %p326 = pneg %p191
        %s327 = sand.u32 %s181, 1
        %s328 = scalar_lea.sflag [#allocation4], %s327
        %s329 = sand.u32 %s181, 1
        %s330 = smul.addr %s329, 16
        %s331 = scalar_lea.vmem [#allocation3], %s330
        %v333 = vld [vmem:[%s303] sm:$0xf]
        %v334 = vld [vmem:[%s303 + $0x4] sm:$0xf]
        %v335 = vld [vmem:[%s303 + $0x8] sm:$0xf]
        %v336 = vld [vmem:[%s303 + $0xc] sm:$0xf]
        %v337 = vld [vmem:[%s1] sm:$0xf]
        %v338 = vld [vmem:[%s1 + $0x4] sm:$0xf]
        %v339 = vld [vmem:[%s1 + $0x8] sm:$0xf]
        %v340 = vld [vmem:[%s1 + $0xc] sm:$0xf]
        %v341 = vld [vmem:[%s2] sm:$0xff]
        %v342 = vld [vmem:[%s2 + $0x8] sm:$0xff]
        %v343 = vld [vmem:[%s2 + $0x10] sm:$0xff]
        %v344 = vld [vmem:[%s2 + $0x18] sm:$0xff]
        %346 = vset.pattern.permute.xlu0 0
        %347 = vperm.xlu0 %346, %v341
        %v348 = vpop.permute.xlu0 %347
        %351 = vset.pattern.permute.xlu0 0
        %352 = vperm.xlu0 %351, %v342
        %v353 = vpop.permute.xlu0 %352
        %356 = vset.pattern.permute.xlu0 0
        %357 = vperm.xlu0 %356, %v343
        %v358 = vpop.permute.xlu0 %357
        %361 = vset.pattern.permute.xlu0 0
        %362 = vperm.xlu0 %361, %v344
        %v363 = vpop.permute.xlu0 %362
        %v369 = vunpack.c.l.b16 %v337
        %v370 = vunpack.c.l.b16 %v338
        %v371 = vunpack.c.l.b16 %v339
        %v372 = vunpack.c.l.b16 %v340
        %v373 = vpack.c.b16 %v370, %v369
        %v374 = vpack.c.b16 %v372, %v371
        %v379 = vunpack.c.l.b16 %v333
        %v380 = vunpack.c.l.b16 %v334
        %v381 = vunpack.c.l.b16 %v335
        %v382 = vunpack.c.l.b16 %v336
        %v383 = vpack.c.b16 %v380, %v379
        %v384 = vpack.c.b16 %v382, %v381
        %vm387 = vcmask 261120
        %v389 = vsel %vm387, %v373, 0
        %v392 = vsel %vm387, %v374, 0
        %394 = vmatprep.subr.bf16.mxu0 0
        %395 = vmatpush1.bf16.msra.mxu0 0
        %396 = vmatprep.subr.bf16.mxu0 0
        %397 = vmatpush1.bf16.msra.mxu0 0
        %398 = vmatprep.subr.bf16.mxu0 0
        %399 = vmatpush1.bf16.msra.mxu0 0
        %400 = vmatprep.subr.bf16.mxu0 0
        %401 = vmatpush1.bf16.msra.mxu0 0
        %402 = vmatprep.subr.bf16.mxu0 0
        %403 = vmatpush1.bf16.msra.mxu0 0
        %404 = vmatprep.subr.bf16.mxu0 0
        %405 = vmatpush1.bf16.msra.mxu0 0
        %406 = vmatprep.subr.bf16.mxu0 0
        %407 = vmatpush1.bf16.msra.mxu0 %v384
        %408 = vmatprep.subr.bf16.mxu0 0
        %409 = vmatpush1.bf16.msra.mxu0 %v383
        %410 = vmatprep.subr.bf16.mxu0 0
        %411 = vmatpush2.bf16.msra.mxu0 0
        %412 = vmatprep.subr.bf16.mxu0 0
        %413 = vmatpush2.bf16.msra.mxu0 0
        %414 = vmatprep.subr.bf16.mxu0 0
        %415 = vmatpush2.bf16.msra.mxu0 0
        %416 = vmatprep.subr.bf16.mxu0 0
        %417 = vmatpush2.bf16.msra.mxu0 0
        %418 = vmatprep.subr.bf16.mxu0 0
        %419 = vmatpush2.bf16.msra.mxu0 0
        %420 = vmatprep.subr.bf16.mxu0 0
        %421 = vmatpush2.bf16.msra.mxu0 0
        %422 = vmatprep.subr.bf16.mxu0 0
        %423 = vmatpush2.bf16.msra.mxu0 0
        %424 = vmatprep.subr.bf16.mxu0 0
        %425 = vmatpush2.bf16.msra.mxu0 0
        %426 = vmatprep.mubr.bf16.mxu0 0
        %427 = vmatmul.mubr.bf16.gmra.mxu0 %v389
        %v428 = vpop.f32.mrf.mxu0
        %v429 = vadd.f32 %v348, %v428
        %v430 = vpop.f32.mrf.mxu0
        %v431 = vpop.f32.mrf.mxu0
        %v432 = vadd.f32 %v353, %v431
        %v433 = vpop.f32.mrf.mxu0
        %434 = vmatprep.mubr.bf16.mxu0 0
        %435 = vmatmul.mubr.bf16.gmra.mxu0 %v392
        %v436 = vpop.f32.mrf.mxu0
        %v437 = vadd.f32 %v358, %v436
        %v438 = vpop.f32.mrf.mxu0
        %v439 = vpop.f32.mrf.mxu0
        %v440 = vadd.f32 %v363, %v439
        %v441 = vpop.f32.mrf.mxu0
        %442 = vdwg.mxu0
        %v443 = vpack.c.bf16 %v432, %v429
        %v444 = vpack.c.bf16 %v440, %v437
        %v445 = vmax.bf16 %v443, 0
        %v446 = vmax.bf16 %v444, 0
        %v447 = vld [vmem:[%s3] sm:$0xf]
        %v448 = vld [vmem:[%s3 + $0x4] sm:$0xf]
        %v449 = vld [vmem:[%s3 + $0x8] sm:$0xf]
        %v450 = vld [vmem:[%s3 + $0xc] sm:$0xf]
        %v451 = vld [vmem:[%s3 + $0x10] sm:$0xf]
        %v452 = vld [vmem:[%s3 + $0x14] sm:$0xf]
        %v453 = vld [vmem:[%s3 + $0x18] sm:$0xf]
        %v454 = vld [vmem:[%s3 + $0x1c] sm:$0xf]
        %v455 = vld [vmem:[%s4] sm:$0xff]
        %v456 = vld [vmem:[%s4 + $0x8] sm:$0xff]
        %v457 = vld [vmem:[%s4 + $0x10] sm:$0xff]
        %v458 = vld [vmem:[%s4 + $0x18] sm:$0xff]
        %v459 = vld [vmem:[%s4 + $0x20] sm:$0xff]
        %v460 = vld [vmem:[%s4 + $0x28] sm:$0xff]
        %v461 = vld [vmem:[%s4 + $0x30] sm:$0xff]
        %v462 = vld [vmem:[%s4 + $0x38] sm:$0xff]
        %464 = vset.pattern.permute.xlu0 0
        %465 = vperm.xlu0 %464, %v455
        %v466 = vpop.permute.xlu0 %465
        %469 = vset.pattern.permute.xlu0 0
        %470 = vperm.xlu0 %469, %v456
        %v471 = vpop.permute.xlu0 %470
        %474 = vset.pattern.permute.xlu0 0
        %475 = vperm.xlu0 %474, %v457
        %v476 = vpop.permute.xlu0 %475
        %479 = vset.pattern.permute.xlu0 0
        %480 = vperm.xlu0 %479, %v458
        %v481 = vpop.permute.xlu0 %480
        %484 = vset.pattern.permute.xlu0 0
        %485 = vperm.xlu0 %484, %v459
        %v486 = vpop.permute.xlu0 %485
        %489 = vset.pattern.permute.xlu0 0
        %490 = vperm.xlu0 %489, %v460
        %v491 = vpop.permute.xlu0 %490
        %494 = vset.pattern.permute.xlu0 0
        %495 = vperm.xlu0 %494, %v461
        %v496 = vpop.permute.xlu0 %495
        %499 = vset.pattern.permute.xlu0 0
        %500 = vperm.xlu0 %499, %v462
        %v501 = vpop.permute.xlu0 %500
        %v511 = vunpack.c.l.b16 %v447
        %v512 = vunpack.c.l.b16 %v448
        %v513 = vunpack.c.l.b16 %v449
        %v514 = vunpack.c.l.b16 %v450
        %v515 = vunpack.c.l.b16 %v451
        %v516 = vunpack.c.l.b16 %v452
        %v517 = vunpack.c.l.b16 %v453
        %v518 = vunpack.c.l.b16 %v454
        %v519 = vpack.c.b16 %v512, %v511
        %v520 = vpack.c.b16 %v514, %v513
        %v521 = vpack.c.b16 %v516, %v515
        %v522 = vpack.c.b16 %v518, %v517
        %v524 = vsel %vm387, %v519, 0
        %v527 = vsel %vm387, %v520, 0
        %v530 = vsel %vm387, %v521, 0
        %v533 = vsel %vm387, %v522, 0
        %535 = vmatprep.subr.bf16.mxu0 0
        %536 = vmatpush1.bf16.msra.mxu0 0
        %537 = vmatprep.subr.bf16.mxu0 0
        %538 = vmatpush1.bf16.msra.mxu0 0
        %539 = vmatprep.subr.bf16.mxu0 0
        %540 = vmatpush1.bf16.msra.mxu0 0
        %541 = vmatprep.subr.bf16.mxu0 0
        %542 = vmatpush1.bf16.msra.mxu0 0
        %543 = vmatprep.subr.bf16.mxu0 0
        %544 = vmatpush1.bf16.msra.mxu0 0
        %545 = vmatprep.subr.bf16.mxu0 0
        %546 = vmatpush1.bf16.msra.mxu0 0
        %547 = vmatprep.subr.bf16.mxu0 0
        %548 = vmatpush1.bf16.msra.mxu0 %v446
        %549 = vmatprep.subr.bf16.mxu0 0
        %550 = vmatpush1.bf16.msra.mxu0 %v445
        %551 = vmatprep.subr.bf16.mxu0 0
        %552 = vmatpush2.bf16.msra.mxu0 0
        %553 = vmatprep.subr.bf16.mxu0 0
        %554 = vmatpush2.bf16.msra.mxu0 0
        %555 = vmatprep.subr.bf16.mxu0 0
        %556 = vmatpush2.bf16.msra.mxu0 0
        %557 = vmatprep.subr.bf16.mxu0 0
        %558 = vmatpush2.bf16.msra.mxu0 0
        %559 = vmatprep.subr.bf16.mxu0 0
        %560 = vmatpush2.bf16.msra.mxu0 0
        %561 = vmatprep.subr.bf16.mxu0 0
        %562 = vmatpush2.bf16.msra.mxu0 0
        %563 = vmatprep.subr.bf16.mxu0 0
        %564 = vmatpush2.bf16.msra.mxu0 0
        %565 = vmatprep.subr.bf16.mxu0 0
        %566 = vmatpush2.bf16.msra.mxu0 0
        %567 = vmatprep.mubr.bf16.mxu0 0
        %568 = vmatmul.mubr.bf16.gmra.mxu0 %v524
        %v569 = vpop.f32.mrf.mxu0
        %v570 = vadd.f32 %v466, %v569
        %v571 = vpop.f32.mrf.mxu0
        %v572 = vpop.f32.mrf.mxu0
        %v573 = vadd.f32 %v471, %v572
        %v574 = vpop.f32.mrf.mxu0
        %575 = vmatprep.mubr.bf16.mxu0 0
        %576 = vmatmul.mubr.bf16.gmra.mxu0 %v527
        %v577 = vpop.f32.mrf.mxu0
        %v578 = vadd.f32 %v476, %v577
        %v579 = vpop.f32.mrf.mxu0
        %v580 = vpop.f32.mrf.mxu0
        %v581 = vadd.f32 %v481, %v580
        %v582 = vpop.f32.mrf.mxu0
        %583 = vmatprep.mubr.bf16.mxu0 0
        %584 = vmatmul.mubr.bf16.gmra.mxu0 %v530
        %v585 = vpop.f32.mrf.mxu0
        %v586 = vadd.f32 %v486, %v585
        %v587 = vpop.f32.mrf.mxu0
        %v588 = vpop.f32.mrf.mxu0
        %v589 = vadd.f32 %v491, %v588
        %v590 = vpop.f32.mrf.mxu0
        %591 = vmatprep.mubr.bf16.mxu0 0
        %592 = vmatmul.mubr.bf16.gmra.mxu0 %v533
        %v593 = vpop.f32.mrf.mxu0
        %v594 = vadd.f32 %v496, %v593
        %v595 = vpop.f32.mrf.mxu0
        %v596 = vpop.f32.mrf.mxu0
        %v597 = vadd.f32 %v501, %v596
        %v598 = vpop.f32.mrf.mxu0
        %599 = vdwg.mxu0
        %v600 = vpack.c.bf16 %v573, %v570
        %v601 = vpack.c.bf16 %v581, %v578
        %v602 = vpack.c.bf16 %v589, %v586
        %v603 = vpack.c.bf16 %v597, %v594
        %v604 = vmax.bf16 %v600, 0
        %v605 = vmax.bf16 %v601, 0
        %v606 = vmax.bf16 %v602, 0
        %v607 = vmax.bf16 %v603, 0
        %v608 = vld [vmem:[%s5] sm:$0xf]
        %v609 = vld [vmem:[%s5 + $0x4] sm:$0xf]
        %v610 = vld [vmem:[%s6] sm:$0xff]
        %v611 = vld [vmem:[%s6 + $0x8] sm:$0xff]
        %613 = vset.pattern.permute.xlu0 0
        %614 = vperm.xlu0 %613, %v610
        %v615 = vpop.permute.xlu0 %614
        %618 = vset.pattern.permute.xlu0 0
        %619 = vperm.xlu0 %618, %v611
        %v620 = vpop.permute.xlu0 %619
        %v624 = vunpack.c.l.b16 %v608
        %v625 = vunpack.c.l.b16 %v609
        %v626 = vpack.c.b16 %v625, %v624
        %vm627 = vcmask 523264
        %v629 = vsel %vm627, %v626, 0
        %631 = vmatprep.subr.bf16.mxu0 0
        %632 = vmatpush1.bf16.msra.mxu0 0
        %633 = vmatprep.subr.bf16.mxu0 0
        %634 = vmatpush1.bf16.msra.mxu0 0
        %635 = vmatprep.subr.bf16.mxu0 0
        %636 = vmatpush1.bf16.msra.mxu0 0
        %637 = vmatprep.subr.bf16.mxu0 0
        %638 = vmatpush1.bf16.msra.mxu0 0
        %639 = vmatprep.subr.bf16.mxu0 0
        %640 = vmatpush1.bf16.msra.mxu0 %v607
        %641 = vmatprep.subr.bf16.mxu0 0
        %642 = vmatpush1.bf16.msra.mxu0 %v606
        %643 = vmatprep.subr.bf16.mxu0 0
        %644 = vmatpush1.bf16.msra.mxu0 %v605
        %645 = vmatprep.subr.bf16.mxu0 0
        %646 = vmatpush1.bf16.msra.mxu0 %v604
        %647 = vmatprep.subr.bf16.mxu0 0
        %648 = vmatpush2.bf16.msra.mxu0 0
        %649 = vmatprep.subr.bf16.mxu0 0
        %650 = vmatpush2.bf16.msra.mxu0 0
        %651 = vmatprep.subr.bf16.mxu0 0
        %652 = vmatpush2.bf16.msra.mxu0 0
        %653 = vmatprep.subr.bf16.mxu0 0
        %654 = vmatpush2.bf16.msra.mxu0 0
        %655 = vmatprep.subr.bf16.mxu0 0
        %656 = vmatpush2.bf16.msra.mxu0 0
        %657 = vmatprep.subr.bf16.mxu0 0
        %658 = vmatpush2.bf16.msra.mxu0 0
        %659 = vmatprep.subr.bf16.mxu0 0
        %660 = vmatpush2.bf16.msra.mxu0 0
        %661 = vmatprep.subr.bf16.mxu0 0
        %662 = vmatpush2.bf16.msra.mxu0 0
        %663 = vmatprep.mubr.bf16.mxu0 0
        %664 = vmatmul.mubr.bf16.gmra.mxu0 %v629
        %v665 = vpop.f32.mrf.mxu0
        %v666 = vadd.f32 %v615, %v665
        %v667 = vpop.f32.mrf.mxu0
        %v668 = vpop.f32.mrf.mxu0
        %v669 = vadd.f32 %v620, %v668
        %v670 = vpop.f32.mrf.mxu0
        %671 = vdwg.mxu0
        %672 = vst [vmem:[%s331] sm:$0xff] %v666
        %673 = vst [vmem:[%s331 + $0x8] sm:$0xff] %v669
        %s674 = sand.u32 %s181, 1
        %s675 = scalar_lea.sflag [#allocation4], %s674
        %s676 = sand.u32 %s181, 1
        %s677 = smul.addr %s676, 16
        %s678 = scalar_lea.vmem [#allocation3], %s677
        // Predicated region
        $region90: #{tpu_custom_call.1} parent=84 // pred_check
          %p679 = pneg %p191
        $region91: #{tpu_custom_call.1} parent=84 // pred_check_branch
          %681 = sbr.rel (%p679) target = $region93
        $region92: #{tpu_custom_call.1} parent=84 // pred_region
          %s683 = ssub.s32 256, 256
          %684 = vsyncadd %s675, %s683
          %s685 = smul.addr %s21, 128
          %s686 = scalar_lea.hbm %s7, %s685
          %s687 = sshll.u32 %s678, 4
          %s688 = int_to_ptr.vmem [resolvable:$true] %s687
          %693 = dma.vmem_to_hbm [thread:$0]  %s688, 256, %s686, %s675, 128, 512, 8
        $region93: #{tpu_custom_call.1} parent=84 // pred_fallthru
          _
      $region85: #{tpu_custom_call.1} parent=5 // pred_fallthru
        _
      %p694 = scmp.le.s32.totalorder 2, %s16
      // Predicated region
      $region94: #{tpu_custom_call.1} parent=5 // pred_check
        %p695 = pneg %p694
      $region95: #{tpu_custom_call.1} parent=5 // pred_check_branch
        %697 = sbr.rel (%p695) target = $region97
      $region96: #{tpu_custom_call.1} parent=5 // pred_region
        %s698 = ssub.s32 %s16, 2
        // Predicated region
        $region98: #{tpu_custom_call.1} parent=96 // pred_check
          %p699 = pneg %p197
        $region99: #{tpu_custom_call.1} parent=96 // pred_check_branch
          %701 = sbr.rel (%p699) target = $region101
        $region100: #{tpu_custom_call.1} parent=96 // pred_region
          %s702 = sand.u32 %s182, 1
          %s703 = scalar_lea.sflag [#allocation4], %s702
          %s704 = sand.u32 %s182, 1
          %s705 = smul.addr %s704, 16
          %s706 = scalar_lea.vmem [#allocation3], %s705
          %707 = dma.done %s703, 256
        $region101: #{tpu_custom_call.1} parent=96 // pred_fallthru
          _
      $region97: #{tpu_custom_call.1} parent=5 // pred_fallthru
        _
    $region6: #{tpu_custom_call.1} parent=1 // loop_footer
      %s20 = sadd.s32 1, %s16
    $region7: #{tpu_custom_call.1} parent=1 // loop_footer_branch
      %15 = sbr.rel target = $region3
    $region8: #{tpu_custom_call.1} parent=1 // loop_exit
      _
    %708 = vsyncpa [#allocation4], 1
    %s709 = scalar_lea.sflag [#allocation4], 1
    %710 = vsyncpa %s709, 1

</llo_original>
